<compile_context>
chip_gen: v7x
topology: tpu7x:2x2x1
jax: 0.10.0
libtpu: 0.0.40
codegen_flags: <defaults>
</compile_context>

<pallas_src>
import jax
import jax.numpy as jnp
from jax import lax
from jax.experimental import pallas as pl
from jax.experimental.pallas import tpu as pltpu

H1_PAD = 256   # fcs1_units = 200 padded to MXU/lane-native width
H2_PAD = 128   # fc2_units  = 100 padded to lane width


def _round_up(x, m):
    return (x + m - 1) // m * m


def critic_kernel(x_ref, w1_ref, b1_ref, w2_ref, b2_ref, w3_ref, b3_ref,
                  out_ref):
    # fc1 over the (pre-concatenated, zero-padded) [state|action] block.
    # bf16 at the MXU boundary, f32 accumulation; padded lanes have zero
    # weights + zero bias so ReLU keeps them exactly 0.
    x = x_ref[...].astype(jnp.bfloat16)                         # (TB, K_pad)
    h1 = jnp.dot(x, w1_ref[...], preferred_element_type=jnp.float32)
    h1 = jnp.maximum(h1 + b1_ref[...], 0.0)                     # (TB, 256) f32

    h2 = jnp.dot(h1.astype(jnp.bfloat16), w2_ref[...],
                 preferred_element_type=jnp.float32)
    h2 = jnp.maximum(h2 + b2_ref[...], 0.0)                     # (TB, 128) f32

    # fc3 has a single output feature: contract w3 (1,128) with h2 (TB,128) on
    # the 128-dim so the result is a lane-dense (1, TB) row (unmasked stores).
    out = lax.dot_general(w3_ref[...], h2.astype(jnp.bfloat16),
                          dimension_numbers=(((1,), (1,)), ((), ())),
                          preferred_element_type=jnp.float32)   # (1, TB)
    out_ref[...] = (out + b3_ref[...]).astype(out_ref.dtype)


def critic_forward(state, action, packed_params, *, tile_b=2048):
    """state: (B, state_size) f32, action: (B, 1) f32. Returns (B, 1) f32."""
    w1, b1, w2, b2, w3, b3 = packed_params
    B, S = state.shape
    K_pad = w1.shape[0]

    # TB must be a multiple of 128 (it is the lane dim of the output block).
    # Cap at ceil(B/2) so large batches always produce >=2 grid steps (both
    # v7x TensorCores busy); default 2048 amortizes per-step overhead.
    TB = min(_round_up(tile_b, 128), max(128, _round_up(-(-B // 2), 128)))
    B_pad = _round_up(B, TB)
    grid = (B_pad // TB,)

    # Virtual concat [state | action | 0...] padded to (B_pad, K_pad).
    x = jnp.concatenate([state, action.reshape(B, 1)], axis=1)   # (B, S+1)
    x = jnp.pad(x, ((0, B_pad - B), (0, K_pad - (S + 1))))

    flops = 2 * B_pad * (K_pad * H1_PAD + H1_PAD * H2_PAD + H2_PAD)
    bytes_accessed = int(
        x.size * 4 + B_pad * 4
        + sum(int(p.size) * p.dtype.itemsize for p in packed_params))

    out = pl.pallas_call(
        critic_kernel,
        out_shape=jax.ShapeDtypeStruct((1, B_pad), jnp.float32),
        grid=grid,
        in_specs=[
            pl.BlockSpec((TB, K_pad), lambda i: (i, 0)),   # x, batch-tiled
            pl.BlockSpec(w1.shape, lambda i: (0, 0)),      # weights pinned in VMEM
            pl.BlockSpec(b1.shape, lambda i: (0, 0)),
            pl.BlockSpec(w2.shape, lambda i: (0, 0)),
            pl.BlockSpec(b2.shape, lambda i: (0, 0)),
            pl.BlockSpec(w3.shape, lambda i: (0, 0)),
            pl.BlockSpec(b3.shape, lambda i: (0, 0)),
        ],
        out_specs=pl.BlockSpec((1, TB), lambda i: (0, i)),  # lane-dense output
        compiler_params=pltpu.CompilerParams(
            dimension_semantics=("parallel",),              # shard tiles over TCs
            vmem_limit_bytes=32 << 20,                      # v7x-safe; plenty for TB<=4096
        ),
        cost_estimate=pl.CostEstimate(
            flops=flops, transcendentals=0, bytes_accessed=bytes_accessed),
    )(x, w1, b1, w2, b2, w3, b3)

    return out[0, :B].reshape(B, 1)


def init_params(key, state_size, fcs1_units=200, fc2_units=100):
    """nn.Linear-style init: U(-1/sqrt(fan_in), +1/sqrt(fan_in)), f32, unpadded."""
    dims = [(state_size + 1, fcs1_units), (fcs1_units, fc2_units), (fc2_units, 1)]
    params = []
    for fan_in, fan_out in dims:
        key, kw, kb = jax.random.split(key, 3)
        bound = 1.0 / jnp.sqrt(fan_in)
        w = jax.random.uniform(kw, (fan_in, fan_out), jnp.float32, -bound, bound)
        b = jax.random.uniform(kb, (1, fan_out), jnp.float32, -bound, bound)
        params += [w, b]
    return tuple(params)


def pack_params(params, state_size):
    """Zero-pad hidden dims to 256/128, pad fc1's input dim (state+action) to a
    multiple of 8, store fc3 weight as a (1, 128) row, cast MXU operands to
    bf16 (biases stay f32)."""
    w1, b1, w2, b2, w3, b3 = params
    K = state_size + 1
    K_pad = _round_up(K, 8)
    H1, H2 = w1.shape[1], w2.shape[1]

    w1p = jnp.zeros((K_pad, H1_PAD), jnp.float32).at[:K, :H1].set(w1)
    b1p = jnp.zeros((1, H1_PAD), jnp.float32).at[:, :H1].set(b1)
    w2p = jnp.zeros((H1_PAD, H2_PAD), jnp.float32).at[:H1, :H2].set(w2)
    b2p = jnp.zeros((1, H2_PAD), jnp.float32).at[:, :H2].set(b2)
    w3p = jnp.zeros((1, H2_PAD), jnp.float32).at[:, :H2].set(w3.T)
    b3p = b3.reshape(1, 1).astype(jnp.float32)

    return (w1p.astype(jnp.bfloat16), b1p,
            w2p.astype(jnp.bfloat16), b2p,
            w3p.astype(jnp.bfloat16), b3p)


if __name__ == "__main__":
    STATE_SIZE = 32
    BATCH = 2

    key = jax.random.PRNGKey(0)
    kp, ks, ka = jax.random.split(key, 3)

    params = init_params(kp, STATE_SIZE)
    packed = pack_params(params, STATE_SIZE)

    state = jax.random.normal(ks, (BATCH, STATE_SIZE), jnp.float32)
    action = jax.random.normal(ka, (BATCH, 1), jnp.float32)

    out = critic_forward(state, action, packed)
    jax.block_until_ready(out)

    # Pure-JAX f32 reference (unpadded params); bf16 MXU operands -> loose tol.
    w1, b1, w2, b2, w3, b3 = params
    x = jnp.concatenate([state, action], axis=1)
    ref = jnp.maximum(x @ w1 + b1, 0.0)
    ref = jnp.maximum(ref @ w2 + b2, 0.0)
    ref = ref @ w3 + b3

    assert out.shape == (BATCH, 1)
    assert jnp.allclose(out, ref, atol=5e-2, rtol=5e-2), (out, ref)

    print("KERNEL_OK")
</pallas_src>

<mosaic_0001>
module attributes {stable_mosaic.version = 11 : i64} {
  func.func @critic_kernel(%arg0: i32, %arg1: memref<128x40xf32, #tpu.memory_space<vmem>>, %arg2: memref<40x256xbf16, #tpu.memory_space<vmem>>, %arg3: memref<1x256xf32, #tpu.memory_space<vmem>>, %arg4: memref<256x128xbf16, #tpu.memory_space<vmem>>, %arg5: memref<1x128xf32, #tpu.memory_space<vmem>>, %arg6: memref<1x128xbf16, #tpu.memory_space<vmem>>, %arg7: memref<1x1xf32, #tpu.memory_space<vmem>>, %arg8: memref<1x128xf32, #tpu.memory_space<vmem>>) attributes {dimension_semantics = [#tpu.dimension_semantics<parallel>], iteration_bounds = array<i64: 1>, scalar_prefetch = 0 : i64, scratch_operands = 0 : i64, tpu.core_type = #tpu.core_type<tc>, window_params = [{transform_indices = @transform_0, window_bounds = array<i64: 128, 40>}, {pipeline_mode = #tpu.pipeline_mode<synchronous>, transform_indices = @transform_1, window_bounds = array<i64: 40, 256>}, {pipeline_mode = #tpu.pipeline_mode<synchronous>, transform_indices = @transform_2, window_bounds = array<i64: 1, 256>}, {pipeline_mode = #tpu.pipeline_mode<synchronous>, transform_indices = @transform_3, window_bounds = array<i64: 256, 128>}, {pipeline_mode = #tpu.pipeline_mode<synchronous>, transform_indices = @transform_4, window_bounds = array<i64: 1, 128>}, {pipeline_mode = #tpu.pipeline_mode<synchronous>, transform_indices = @transform_5, window_bounds = array<i64: 1, 128>}, {pipeline_mode = #tpu.pipeline_mode<synchronous>, transform_indices = @transform_6, window_bounds = array<i64: 1, 1>}, {transform_indices = @transform_7, window_bounds = array<i64: 1, 128>}]} {
    %c0 = arith.constant 0 : index
    %c0_0 = arith.constant 0 : index
    %0 = vector.load %arg1[%c0, %c0_0] : memref<128x40xf32, #tpu.memory_space<vmem>>, vector<128x40xf32>
    %1 = arith.truncf %0 : vector<128x40xf32> to vector<128x40xbf16>
    %c0_1 = arith.constant 0 : index
    %c0_2 = arith.constant 0 : index
    %2 = vector.load %arg2[%c0_1, %c0_2] : memref<40x256xbf16, #tpu.memory_space<vmem>>, vector<40x256xbf16>
    %cst = arith.constant dense<0.000000e+00> : vector<128x256xf32>
    %3 = tpu.matmul %1, %2, %cst {dimension_numbers = #tpu.dot_dimension_numbers<[1], [0], [0], [1], [0, 0, 1, 1], [], []>} : vector<128x40xbf16>, vector<40x256xbf16>, vector<128x256xf32> -> vector<128x256xf32>
    %c0_3 = arith.constant 0 : index
    %c0_4 = arith.constant 0 : index
    %4 = vector.load %arg3[%c0_3, %c0_4] : memref<1x256xf32, #tpu.memory_space<vmem>>, vector<1x256xf32>
    %5 = vector.broadcast %4 : vector<1x256xf32> to vector<128x256xf32>
    %6 = arith.addf %3, %5 : vector<128x256xf32>
    %cst_5 = arith.constant 0.000000e+00 : f32
    %7 = vector.broadcast %cst_5 : f32 to vector<128x256xf32>
    %8 = arith.maximumf %6, %7 : vector<128x256xf32>
    %9 = arith.truncf %8 : vector<128x256xf32> to vector<128x256xbf16>
    %c0_6 = arith.constant 0 : index
    %c0_7 = arith.constant 0 : index
    %10 = vector.load %arg4[%c0_6, %c0_7] : memref<256x128xbf16, #tpu.memory_space<vmem>>, vector<256x128xbf16>
    %cst_8 = arith.constant dense<0.000000e+00> : vector<128x128xf32>
    %11 = tpu.matmul %9, %10, %cst_8 {dimension_numbers = #tpu.dot_dimension_numbers<[1], [0], [0], [1], [0, 0, 1, 1], [], []>} : vector<128x256xbf16>, vector<256x128xbf16>, vector<128x128xf32> -> vector<128x128xf32>
    %c0_9 = arith.constant 0 : index
    %c0_10 = arith.constant 0 : index
    %12 = vector.load %arg5[%c0_9, %c0_10] : memref<1x128xf32, #tpu.memory_space<vmem>>, vector<1x128xf32>
    %13 = vector.broadcast %12 : vector<1x128xf32> to vector<128x128xf32>
    %14 = arith.addf %11, %13 : vector<128x128xf32>
    %cst_11 = arith.constant 0.000000e+00 : f32
    %15 = vector.broadcast %cst_11 : f32 to vector<128x128xf32>
    %16 = arith.maximumf %14, %15 : vector<128x128xf32>
    %c0_12 = arith.constant 0 : index
    %c0_13 = arith.constant 0 : index
    %17 = vector.load %arg6[%c0_12, %c0_13] : memref<1x128xbf16, #tpu.memory_space<vmem>>, vector<1x128xbf16>
    %18 = arith.truncf %16 : vector<128x128xf32> to vector<128x128xbf16>
    %cst_14 = arith.constant dense<0.000000e+00> : vector<1x128xf32>
    %19 = tpu.matmul %17, %18, %cst_14 {dimension_numbers = #tpu.dot_dimension_numbers<[1], [1], [0], [0], [0, 0, 1, 0], [], []>} : vector<1x128xbf16>, vector<128x128xbf16>, vector<1x128xf32> -> vector<1x128xf32>
    %c0_15 = arith.constant 0 : index
    %c0_16 = arith.constant 0 : index
    %20 = vector.load %arg7[%c0_15, %c0_16] : memref<1x1xf32, #tpu.memory_space<vmem>>, vector<1x1xf32>
    %21 = vector.broadcast %20 : vector<1x1xf32> to vector<1x128xf32>
    %22 = arith.addf %19, %21 : vector<1x128xf32>
    %c0_17 = arith.constant 0 : index
    %c0_18 = arith.constant 0 : index
    %23 = vector.load %arg8[%c0_17, %c0_18] : memref<1x128xf32, #tpu.memory_space<vmem>>, vector<1x128xf32>
    tpu.vector_store %arg8[%c0_17, %c0_18], %22 {strides = array<i32>} : memref<1x128xf32, #tpu.memory_space<vmem>>, vector<1x128xf32>,
    return
  }
  func.func @transform_0(%arg0: i32) -> (i32, i32) {
    %c0_i32 = arith.constant 0 : i32
    %c0_i32_0 = arith.constant 0 : i32
    return %arg0, %c0_i32 : i32, i32
  }
  func.func @transform_1(%arg0: i32) -> (i32, i32) {
    %c0_i32 = arith.constant 0 : i32
    %c0_i32_0 = arith.constant 0 : i32
    %c0_i32_1 = arith.constant 0 : i32
    return %c0_i32, %c0_i32_0 : i32, i32
  }
  func.func @transform_2(%arg0: i32) -> (i32, i32) {
    %c0_i32 = arith.constant 0 : i32
    %c0_i32_0 = arith.constant 0 : i32
    %c0_i32_1 = arith.constant 0 : i32
    return %c0_i32, %c0_i32_0 : i32, i32
  }
  func.func @transform_3(%arg0: i32) -> (i32, i32) {
    %c0_i32 = arith.constant 0 : i32
    %c0_i32_0 = arith.constant 0 : i32
    %c0_i32_1 = arith.constant 0 : i32
    return %c0_i32, %c0_i32_0 : i32, i32
  }
  func.func @transform_4(%arg0: i32) -> (i32, i32) {
    %c0_i32 = arith.constant 0 : i32
    %c0_i32_0 = arith.constant 0 : i32
    %c0_i32_1 = arith.constant 0 : i32
    return %c0_i32, %c0_i32_0 : i32, i32
  }
  func.func @transform_5(%arg0: i32) -> (i32, i32) {
    %c0_i32 = arith.constant 0 : i32
    %c0_i32_0 = arith.constant 0 : i32
    %c0_i32_1 = arith.constant 0 : i32
    return %c0_i32, %c0_i32_0 : i32, i32
  }
  func.func @transform_6(%arg0: i32) -> (i32, i32) {
    %c0_i32 = arith.constant 0 : i32
    %c0_i32_0 = arith.constant 0 : i32
    %c0_i32_1 = arith.constant 0 : i32
    return %c0_i32, %c0_i32_0 : i32, i32
  }
  func.func @transform_7(%arg0: i32) -> (i32, i32) {
    %c0_i32 = arith.constant 0 : i32
    %c0_i32_0 = arith.constant 0 : i32
    return %c0_i32, %arg0 : i32, i32
  }
}

</mosaic_0001>

<llo_original>
// kernel: tpu_custom_call.1
$region0: #{tpu_custom_call.1}
  #allocation0 [shape = 'u32[]', space=smem, size = 0x4, offset = 0x4, fixed_abs, tag = 'smem constant byte address 0x4 - core index']
  #allocation1 [shape = 'u32[144,128]{1,0:T(1,128)}', space=vmem, size = 0x12000, scoped, tag = 'internal scratch']
  #allocation2 [shape = 'f32[1,1]{1,0:T(1,128)S(1)}', space=vmem, size = 0x200, scoped, tag = 'scoped memory for tpu_custom_call.1']
  %s0 = inlined_call_operand.vmem [shape: f32[128,40], index: 0, kind: input, shape index: {}]
  %s1 = inlined_call_operand.vmem [shape: bf16[40,256], index: 1, kind: input, shape index: {}]
  %s2 = inlined_call_operand.vmem [shape: f32[1,256], index: 2, kind: input, shape index: {}]
  %s3 = inlined_call_operand.vmem [shape: bf16[256,128], index: 3, kind: input, shape index: {}]
  %s4 = inlined_call_operand.vmem [shape: f32[1,128], index: 4, kind: input, shape index: {}]
  %s5 = inlined_call_operand.vmem [shape: bf16[1,128], index: 5, kind: input, shape index: {}]
  %s6 = inlined_call_operand.<no memory space> [shape: f32[1,1], index: 6, kind: input, shape index: {}]
  %s7 = inlined_call_operand.hbm [shape: f32[1,128], index: 7, kind: output, shape index: {}]
  %s8 = sld [smem:[#allocation0]]
  $region38: #{tpu_custom_call.1} parent=0
    _
  %s10 = ssub.s32 1, %s8
  %s11 = scalar_select 0, %s10, %s8
  %v12 = vstv %s6
  %13 = vst [vmem:[#allocation2] sm:$0x1] %v12
  $region1: #{tpu_custom_call.1} parent=0
    #allocation3 [shape = 'u8[512]{0}', space=vmem, size = 0x400, scoped, tag = 'output window, operand 0, single buffered']
    #allocation4 [shape = 's32[1]{0}', space=sflag, size = 0x4, scoped, tag = 'scoped memory for tpu_custom_call.1']
    %14 = vsyncpa [#allocation4], 0
    // Predicated region
    $region2: #{tpu_custom_call.1} parent=1 // pred_check
      _
    $region3: #{tpu_custom_call.1} parent=1 // pred_check_branch
      %16 = sbr.rel (0) target = $region5
    $region4: #{tpu_custom_call.1} parent=1 // pred_region
      _
    $region5: #{tpu_custom_call.1} parent=1 // pred_fallthru
      _
    // Predicated region
    $region6: #{tpu_custom_call.1} parent=1 // pred_check
      _
    $region7: #{tpu_custom_call.1} parent=1 // pred_check_branch
      %18 = sbr.rel (0) target = $region9
    $region8: #{tpu_custom_call.1} parent=1 // pred_region
      _
    $region9: #{tpu_custom_call.1} parent=1 // pred_fallthru
      _
    // Predicated region
    $region10: #{tpu_custom_call.1} parent=1 // pred_check
      _
    $region11: #{tpu_custom_call.1} parent=1 // pred_check_branch
      %20 = sbr.rel (0) target = $region13
    $region12: #{tpu_custom_call.1} parent=1 // pred_region
      _
    $region13: #{tpu_custom_call.1} parent=1 // pred_fallthru
      _
    // Predicated region
    $region14: #{tpu_custom_call.1} parent=1 // pred_check
      _
    $region15: #{tpu_custom_call.1} parent=1 // pred_check_branch
      %22 = sbr.rel (0) target = $region17
    $region16: #{tpu_custom_call.1} parent=1 // pred_region
      _
    $region17: #{tpu_custom_call.1} parent=1 // pred_fallthru
      _
    // Predicated region
    $region18: #{tpu_custom_call.1} parent=1 // pred_check
      _
    $region19: #{tpu_custom_call.1} parent=1 // pred_check_branch
      %24 = sbr.rel (0) target = $region21
    $region20: #{tpu_custom_call.1} parent=1 // pred_region
      _
    $region21: #{tpu_custom_call.1} parent=1 // pred_fallthru
      _
    // Predicated region
    $region22: #{tpu_custom_call.1} parent=1 // pred_check
      _
    $region23: #{tpu_custom_call.1} parent=1 // pred_check_branch
      %26 = sbr.rel (0) target = $region25
    $region24: #{tpu_custom_call.1} parent=1 // pred_region
      _
    $region25: #{tpu_custom_call.1} parent=1 // pred_fallthru
      _
    // Predicated region
    $region26: #{tpu_custom_call.1} parent=1 // pred_check
      _
    $region27: #{tpu_custom_call.1} parent=1 // pred_check_branch
      %28 = sbr.rel (0) target = $region29
    $region28: #{tpu_custom_call.1} parent=1 // pred_region
      _
    $region29: #{tpu_custom_call.1} parent=1 // pred_fallthru
      _
    %v30 = vld [vmem:[%s0] sm:$0xff]
    %v31 = vld [vmem:[%s0 + $0x8] sm:$0xff]
    %v32 = vld [vmem:[%s0 + $0x10] sm:$0xff]
    %v33 = vld [vmem:[%s0 + $0x18] sm:$0xff]
    %v34 = vld [vmem:[%s0 + $0x20] sm:$0xff]
    %v35 = vld [vmem:[%s0 + $0x28] sm:$0xff]
    %v36 = vld [vmem:[%s0 + $0x30] sm:$0xff]
    %v37 = vld [vmem:[%s0 + $0x38] sm:$0xff]
    %v38 = vld [vmem:[%s0 + $0x40] sm:$0xff]
    %v39 = vld [vmem:[%s0 + $0x48] sm:$0xff]
    %v40 = vld [vmem:[%s0 + $0x50] sm:$0xff]
    %v41 = vld [vmem:[%s0 + $0x58] sm:$0xff]
    %v42 = vld [vmem:[%s0 + $0x60] sm:$0xff]
    %v43 = vld [vmem:[%s0 + $0x68] sm:$0xff]
    %v44 = vld [vmem:[%s0 + $0x70] sm:$0xff]
    %v45 = vld [vmem:[%s0 + $0x78] sm:$0xff]
    %v46 = vpack.c.bf16 %v31, %v30
    %v47 = vpack.c.bf16 %v33, %v32
    %v48 = vpack.c.bf16 %v35, %v34
    %v49 = vpack.c.bf16 %v37, %v36
    %v50 = vpack.c.bf16 %v39, %v38
    %v51 = vpack.c.bf16 %v41, %v40
    %v52 = vpack.c.bf16 %v43, %v42
    %v53 = vpack.c.bf16 %v45, %v44
    %v54 = vld [vmem:[%s1] sm:$0xff]
    %v55 = vld [vmem:[%s1 + $0x8] sm:$0xff]
    %v56 = vld [vmem:[%s1 + $0x10] sm:$0xff]
    %v57 = vld [vmem:[%s1 + $0x18] sm:$0xff]
    %v58 = vld [vmem:[%s1 + $0x20] sm:$0xff]
    %v59 = vld [vmem:[%s2] sm:$0x3]
    %v61 = vlaneseq
    %v62 = vshrl.u32 %v61, 7
    %v63 = vsub.s32 0, %v62
    %v64 = vrot.slane %v59, %v63
    %v65 = vlaneseq
    %v66 = vshrl.u32 %v65, 7
    %v67 = vsub.s32 1, %v66
    %v68 = vrot.slane %v59, %v67
    %v76 = vunpack.c.l.b16 %v54
    %v77 = vunpack.c.h.b16 %v54
    %v78 = vunpack.c.l.b16 %v55
    %v79 = vunpack.c.h.b16 %v55
    %v80 = vunpack.c.l.b16 %v56
    %v81 = vunpack.c.h.b16 %v56
    %v82 = vunpack.c.l.b16 %v57
    %v83 = vunpack.c.h.b16 %v57
    %v84 = vunpack.c.l.b16 %v58
    %v85 = vunpack.c.h.b16 %v58
    %v86 = vpack.c.b16 %v78, %v76
    %v87 = vpack.c.b16 %v79, %v77
    %v88 = vpack.c.b16 %v82, %v80
    %v89 = vpack.c.b16 %v83, %v81
    %v90 = vpack.c.b16 %v84, %v84
    %v91 = vpack.c.b16 %v85, %v85
    %vm96 = vcmask 326656
    %v98 = vsel %vm96, %v46, 0
    %v101 = vsel %vm96, %v47, 0
    %v104 = vsel %vm96, %v48, 0
    %v107 = vsel %vm96, %v49, 0
    %v110 = vsel %vm96, %v50, 0
    %v113 = vsel %vm96, %v51, 0
    %v116 = vsel %vm96, %v52, 0
    %v119 = vsel %vm96, %v53, 0
    %vm121 = vcmask 1043456
    %v123 = vsel %vm121, %v90, 0
    %v126 = vsel %vm121, %v91, 0
    %128 = vmatprep.subr.bf16.mxu0 %v87
    %129 = vmatpush1.bf16.msra.mxu0 %v86
    %130 = vmatprep.subr.bf16.mxu0 %v89
    %131 = vmatpush1.bf16.msra.mxu0 %v88
    %132 = vmatprep.subr.bf16.mxu0 %v126
    %133 = vmatpush1.bf16.msra.mxu0 %v123
    %134 = vmatprep.subr.bf16.mxu0 0
    %135 = vmatpush1.bf16.msra.mxu0 0
    %136 = vmatprep.subr.bf16.mxu0 0
    %137 = vmatpush1.bf16.msra.mxu0 0
    %138 = vmatprep.subr.bf16.mxu0 0
    %139 = vmatpush1.bf16.msra.mxu0 0
    %140 = vmatprep.subr.bf16.mxu0 0
    %141 = vmatpush1.bf16.msra.mxu0 0
    %142 = vmatprep.subr.bf16.mxu0 0
    %143 = vmatpush1.bf16.msra.mxu0 0
    %144 = vmatprep.subr.bf16.mxu0 0
    %145 = vmatpush1.bf16.msra.mxu0 0
    %146 = vmatprep.subr.bf16.mxu0 0
    %147 = vmatpush1.bf16.msra.mxu0 0
    %148 = vmatprep.subr.bf16.mxu0 0
    %149 = vmatpush1.bf16.msra.mxu0 0
    %150 = vmatprep.subr.bf16.mxu0 0
    %151 = vmatpush1.bf16.msra.mxu0 0
    %152 = vmatprep.subr.bf16.mxu0 0
    %153 = vmatpush1.bf16.msra.mxu0 0
    %154 = vmatprep.subr.bf16.mxu0 0
    %155 = vmatpush1.bf16.msra.mxu0 0
    %156 = vmatprep.subr.bf16.mxu0 0
    %157 = vmatpush1.bf16.msra.mxu0 0
    %158 = vmatprep.subr.bf16.mxu0 0
    %159 = vmatpush1.bf16.msra.mxu0 0
    %160 = vmatprep.mubr.bf16.mxu0 0
    %161 = vmatmul.mubr.bf16.gmra.mrb[0].mxu0 %v98
    %v162 = vpop.f32.mrb[0].mxu0
    %v163 = vadd.f32 %v64, %v162
    %v164 = vpop.f32.mrb[0].mxu0
    %v165 = vadd.f32 %v68, %v164
    %v166 = vpop.f32.mrb[0].mxu0
    %v167 = vadd.f32 %v64, %v166
    %v168 = vpop.f32.mrb[0].mxu0
    %v169 = vadd.f32 %v68, %v168
    %170 = vmatprep.mubr.bf16.mxu0 0
    %171 = vmatmul.mubr.bf16.gmra.mrb[0].mxu0 %v101
    %v172 = vpop.f32.mrb[0].mxu0
    %v173 = vadd.f32 %v64, %v172
    %v174 = vpop.f32.mrb[0].mxu0
    %v175 = vadd.f32 %v68, %v174
    %v176 = vpop.f32.mrb[0].mxu0
    %v177 = vadd.f32 %v64, %v176
    %v178 = vpop.f32.mrb[0].mxu0
    %v179 = vadd.f32 %v68, %v178
    %180 = vmatprep.mubr.bf16.mxu0 0
    %181 = vmatmul.mubr.bf16.gmra.mrb[0].mxu0 %v104
    %v182 = vpop.f32.mrb[0].mxu0
    %v183 = vadd.f32 %v64, %v182
    %v184 = vpop.f32.mrb[0].mxu0
    %v185 = vadd.f32 %v68, %v184
    %v186 = vpop.f32.mrb[0].mxu0
    %v187 = vadd.f32 %v64, %v186
    %v188 = vpop.f32.mrb[0].mxu0
    %v189 = vadd.f32 %v68, %v188
    %190 = vmatprep.mubr.bf16.mxu0 0
    %191 = vmatmul.mubr.bf16.gmra.mrb[0].mxu0 %v107
    %v192 = vpop.f32.mrb[0].mxu0
    %v193 = vadd.f32 %v64, %v192
    %v194 = vpop.f32.mrb[0].mxu0
    %v195 = vadd.f32 %v68, %v194
    %v196 = vpop.f32.mrb[0].mxu0
    %v197 = vadd.f32 %v64, %v196
    %v198 = vpop.f32.mrb[0].mxu0
    %v199 = vadd.f32 %v68, %v198
    %200 = vmatprep.mubr.bf16.mxu0 0
    %201 = vmatmul.mubr.bf16.gmra.mrb[0].mxu0 %v110
    %v202 = vpop.f32.mrb[0].mxu0
    %v203 = vadd.f32 %v64, %v202
    %v204 = vpop.f32.mrb[0].mxu0
    %v205 = vadd.f32 %v68, %v204
    %v206 = vpop.f32.mrb[0].mxu0
    %v207 = vadd.f32 %v64, %v206
    %v208 = vpop.f32.mrb[0].mxu0
    %v209 = vadd.f32 %v68, %v208
    %210 = vmatprep.mubr.bf16.mxu0 0
    %211 = vmatmul.mubr.bf16.gmra.mrb[0].mxu0 %v113
    %v212 = vpop.f32.mrb[0].mxu0
    %v213 = vadd.f32 %v64, %v212
    %v214 = vpop.f32.mrb[0].mxu0
    %v215 = vadd.f32 %v68, %v214
    %v216 = vpop.f32.mrb[0].mxu0
    %v217 = vadd.f32 %v64, %v216
    %v218 = vpop.f32.mrb[0].mxu0
    %v219 = vadd.f32 %v68, %v218
    %220 = vmatprep.mubr.bf16.mxu0 0
    %221 = vmatmul.mubr.bf16.gmra.mrb[0].mxu0 %v116
    %v222 = vpop.f32.mrb[0].mxu0
    %v223 = vadd.f32 %v64, %v222
    %v224 = vpop.f32.mrb[0].mxu0
    %v225 = vadd.f32 %v68, %v224
    %v226 = vpop.f32.mrb[0].mxu0
    %v227 = vadd.f32 %v64, %v226
    %v228 = vpop.f32.mrb[0].mxu0
    %v229 = vadd.f32 %v68, %v228
    %230 = vmatprep.mubr.bf16.mxu0 0
    %231 = vmatmul.mubr.bf16.gmra.mrb[0].mxu0 %v119
    %v232 = vpop.f32.mrb[0].mxu0
    %v233 = vadd.f32 %v64, %v232
    %v234 = vpop.f32.mrb[0].mxu0
    %v235 = vadd.f32 %v68, %v234
    %v236 = vpop.f32.mrb[0].mxu0
    %v237 = vadd.f32 %v64, %v236
    %v238 = vpop.f32.mrb[0].mxu0
    %v239 = vadd.f32 %v68, %v238
    %240 = vdwg.mxu0
    %v241 = vmax.f32 %v163, 0.0
    %v242 = vmax.f32 %v165, 0.0
    %v243 = vmax.f32 %v167, 0.0
    %v244 = vmax.f32 %v169, 0.0
    %v245 = vmax.f32 %v173, 0.0
    %v246 = vmax.f32 %v175, 0.0
    %v247 = vmax.f32 %v177, 0.0
    %v248 = vmax.f32 %v179, 0.0
    %v249 = vmax.f32 %v183, 0.0
    %v250 = vmax.f32 %v185, 0.0
    %v251 = vmax.f32 %v187, 0.0
    %v252 = vmax.f32 %v189, 0.0
    %v253 = vmax.f32 %v193, 0.0
    %v254 = vmax.f32 %v195, 0.0
    %v255 = vmax.f32 %v197, 0.0
    %v256 = vmax.f32 %v199, 0.0
    %v257 = vmax.f32 %v203, 0.0
    %v258 = vmax.f32 %v205, 0.0
    %v259 = vmax.f32 %v207, 0.0
    %v260 = vmax.f32 %v209, 0.0
    %v261 = vmax.f32 %v213, 0.0
    %v262 = vmax.f32 %v215, 0.0
    %v263 = vmax.f32 %v217, 0.0
    %v264 = vmax.f32 %v219, 0.0
    %v265 = vmax.f32 %v223, 0.0
    %v266 = vmax.f32 %v225, 0.0
    %v267 = vmax.f32 %v227, 0.0
    %v268 = vmax.f32 %v229, 0.0
    %v269 = vmax.f32 %v233, 0.0
    %v270 = vmax.f32 %v235, 0.0
    %v271 = vmax.f32 %v237, 0.0
    %v272 = vmax.f32 %v239, 0.0
    %v273 = vpack.c.bf16 %v243, %v241
    %v274 = vpack.c.bf16 %v244, %v242
    %v275 = vpack.c.bf16 %v247, %v245
    %v276 = vpack.c.bf16 %v248, %v246
    %v277 = vpack.c.bf16 %v251, %v249
    %v278 = vpack.c.bf16 %v252, %v250
    %v279 = vpack.c.bf16 %v255, %v253
    %v280 = vpack.c.bf16 %v256, %v254
    %v281 = vpack.c.bf16 %v259, %v257
    %v282 = vpack.c.bf16 %v260, %v258
    %v283 = vpack.c.bf16 %v263, %v261
    %v284 = vpack.c.bf16 %v264, %v262
    %v285 = vpack.c.bf16 %v267, %v265
    %v286 = vpack.c.bf16 %v268, %v266
    %v287 = vpack.c.bf16 %v271, %v269
    %v288 = vpack.c.bf16 %v272, %v270
    %v289 = vld [vmem:[%s3] sm:$0xf]
    %v290 = vld [vmem:[%s3 + $0x4] sm:$0xf]
    %v291 = vld [vmem:[%s3 + $0x8] sm:$0xf]
    %v292 = vld [vmem:[%s3 + $0xc] sm:$0xf]
    %v293 = vld [vmem:[%s3 + $0x10] sm:$0xf]
    %v294 = vld [vmem:[%s3 + $0x14] sm:$0xf]
    %v295 = vld [vmem:[%s3 + $0x18] sm:$0xf]
    %v296 = vld [vmem:[%s3 + $0x1c] sm:$0xf]
    %v297 = vld [vmem:[%s3 + $0x20] sm:$0xf]
    %v298 = vld [vmem:[%s3 + $0x24] sm:$0xf]
    %v299 = vld [vmem:[%s3 + $0x28] sm:$0xf]
    %v300 = vld [vmem:[%s3 + $0x2c] sm:$0xf]
    %v301 = vld [vmem:[%s3 + $0x30] sm:$0xf]
    %v302 = vld [vmem:[%s3 + $0x34] sm:$0xf]
    %v303 = vld [vmem:[%s3 + $0x38] sm:$0xf]
    %v304 = vld [vmem:[%s3 + $0x3c] sm:$0xf]
    %v305 = vld [vmem:[%s3 + $0x40] sm:$0xf]
    %v306 = vld [vmem:[%s3 + $0x44] sm:$0xf]
    %v307 = vld [vmem:[%s3 + $0x48] sm:$0xf]
    %v308 = vld [vmem:[%s3 + $0x4c] sm:$0xf]
    %v309 = vld [vmem:[%s3 + $0x50] sm:$0xf]
    %v310 = vld [vmem:[%s3 + $0x54] sm:$0xf]
    %v311 = vld [vmem:[%s3 + $0x58] sm:$0xf]
    %v312 = vld [vmem:[%s3 + $0x5c] sm:$0xf]
    %v313 = vld [vmem:[%s3 + $0x60] sm:$0xf]
    %v314 = vld [vmem:[%s3 + $0x64] sm:$0xf]
    %v315 = vld [vmem:[%s3 + $0x68] sm:$0xf]
    %v316 = vld [vmem:[%s3 + $0x6c] sm:$0xf]
    %v317 = vld [vmem:[%s3 + $0x70] sm:$0xf]
    %v318 = vld [vmem:[%s3 + $0x74] sm:$0xf]
    %v319 = vld [vmem:[%s3 + $0x78] sm:$0xf]
    %v320 = vld [vmem:[%s3 + $0x7c] sm:$0xf]
    %v321 = vld [vmem:[%s4] sm:$0x1]
    %v323 = vlaneseq
    %v324 = vshrl.u32 %v323, 7
    %v325 = vsub.s32 0, %v324
    %v326 = vrot.slane %v321, %v325
    %v360 = vunpack.c.l.b16 %v289
    %v361 = vunpack.c.l.b16 %v290
    %v362 = vunpack.c.l.b16 %v291
    %v363 = vunpack.c.l.b16 %v292
    %v364 = vunpack.c.l.b16 %v293
    %v365 = vunpack.c.l.b16 %v294
    %v366 = vunpack.c.l.b16 %v295
    %v367 = vunpack.c.l.b16 %v296
    %v368 = vunpack.c.l.b16 %v297
    %v369 = vunpack.c.l.b16 %v298
    %v370 = vunpack.c.l.b16 %v299
    %v371 = vunpack.c.l.b16 %v300
    %v372 = vunpack.c.l.b16 %v301
    %v373 = vunpack.c.l.b16 %v302
    %v374 = vunpack.c.l.b16 %v303
    %v375 = vunpack.c.l.b16 %v304
    %v376 = vunpack.c.l.b16 %v305
    %v377 = vunpack.c.l.b16 %v306
    %v378 = vunpack.c.l.b16 %v307
    %v379 = vunpack.c.l.b16 %v308
    %v380 = vunpack.c.l.b16 %v309
    %v381 = vunpack.c.l.b16 %v310
    %v382 = vunpack.c.l.b16 %v311
    %v383 = vunpack.c.l.b16 %v312
    %v384 = vunpack.c.l.b16 %v313
    %v385 = vunpack.c.l.b16 %v314
    %v386 = vunpack.c.l.b16 %v315
    %v387 = vunpack.c.l.b16 %v316
    %v388 = vunpack.c.l.b16 %v317
    %v389 = vunpack.c.l.b16 %v318
    %v390 = vunpack.c.l.b16 %v319
    %v391 = vunpack.c.l.b16 %v320
    %v392 = vpack.c.b16 %v361, %v360
    %v393 = vpack.c.b16 %v363, %v362
    %v394 = vpack.c.b16 %v365, %v364
    %v395 = vpack.c.b16 %v367, %v366
    %v396 = vpack.c.b16 %v369, %v368
    %v397 = vpack.c.b16 %v371, %v370
    %v398 = vpack.c.b16 %v373, %v372
    %v399 = vpack.c.b16 %v375, %v374
    %v400 = vpack.c.b16 %v377, %v376
    %v401 = vpack.c.b16 %v379, %v378
    %v402 = vpack.c.b16 %v381, %v380
    %v403 = vpack.c.b16 %v383, %v382
    %v404 = vpack.c.b16 %v385, %v384
    %v405 = vpack.c.b16 %v387, %v386
    %v406 = vpack.c.b16 %v389, %v388
    %v407 = vpack.c.b16 %v391, %v390
    %424 = vmatprep.subr.bf16.mxu0 0
    %425 = vmatpush1.bf16.msra.mxu0 %v392
    %426 = vmatprep.subr.bf16.mxu0 0
    %427 = vmatpush1.bf16.msra.mxu0 %v393
    %428 = vmatprep.subr.bf16.mxu0 0
    %429 = vmatpush1.bf16.msra.mxu0 %v394
    %430 = vmatprep.subr.bf16.mxu0 0
    %431 = vmatpush1.bf16.msra.mxu0 %v395
    %432 = vmatprep.subr.bf16.mxu0 0
    %433 = vmatpush1.bf16.msra.mxu0 %v396
    %434 = vmatprep.subr.bf16.mxu0 0
    %435 = vmatpush1.bf16.msra.mxu0 %v397
    %436 = vmatprep.subr.bf16.mxu0 0
    %437 = vmatpush1.bf16.msra.mxu0 %v398
    %438 = vmatprep.subr.bf16.mxu0 0
    %439 = vmatpush1.bf16.msra.mxu0 %v399
    %440 = vmatprep.subr.bf16.mxu0 0
    %441 = vmatpush1.bf16.msra.mxu0 %v400
    %442 = vmatprep.subr.bf16.mxu0 0
    %443 = vmatpush1.bf16.msra.mxu0 %v401
    %444 = vmatprep.subr.bf16.mxu0 0
    %445 = vmatpush1.bf16.msra.mxu0 %v402
    %446 = vmatprep.subr.bf16.mxu0 0
    %447 = vmatpush1.bf16.msra.mxu0 %v403
    %448 = vmatprep.subr.bf16.mxu0 0
    %449 = vmatpush1.bf16.msra.mxu0 %v404
    %450 = vmatprep.subr.bf16.mxu0 0
    %451 = vmatpush1.bf16.msra.mxu0 %v405
    %452 = vmatprep.subr.bf16.mxu0 0
    %453 = vmatpush1.bf16.msra.mxu0 %v406
    %454 = vmatprep.subr.bf16.mxu0 0
    %455 = vmatpush1.bf16.msra.mxu0 %v407
    %456 = vmatprep.mubr.bf16.mxu0 %v274
    %457 = vmatmul.mubr.bf16.gmra.mrb[0].mxu0 %v273
    %v458 = vpop.f32.mrb[0].mxu0
    %v459 = vadd.f32 %v326, %v458
    %v460 = vpop.f32.mrb[0].mxu0
    %v461 = vpop.f32.mrb[0].mxu0
    %v462 = vadd.f32 %v326, %v461
    %v463 = vpop.f32.mrb[0].mxu0
    %464 = vmatprep.mubr.bf16.mxu0 %v276
    %465 = vmatmul.mubr.bf16.gmra.mrb[0].mxu0 %v275
    %v466 = vpop.f32.mrb[0].mxu0
    %v467 = vadd.f32 %v326, %v466
    %v468 = vpop.f32.mrb[0].mxu0
    %v469 = vpop.f32.mrb[0].mxu0
    %v470 = vadd.f32 %v326, %v469
    %v471 = vpop.f32.mrb[0].mxu0
    %472 = vmatprep.mubr.bf16.mxu0 %v278
    %473 = vmatmul.mubr.bf16.gmra.mrb[0].mxu0 %v277
    %v474 = vpop.f32.mrb[0].mxu0
    %v475 = vadd.f32 %v326, %v474
    %v476 = vpop.f32.mrb[0].mxu0
    %v477 = vpop.f32.mrb[0].mxu0
    %v478 = vadd.f32 %v326, %v477
    %v479 = vpop.f32.mrb[0].mxu0
    %480 = vmatprep.mubr.bf16.mxu0 %v280
    %481 = vmatmul.mubr.bf16.gmra.mrb[0].mxu0 %v279
    %v482 = vpop.f32.mrb[0].mxu0
    %v483 = vadd.f32 %v326, %v482
    %v484 = vpop.f32.mrb[0].mxu0
    %v485 = vpop.f32.mrb[0].mxu0
    %v486 = vadd.f32 %v326, %v485
    %v487 = vpop.f32.mrb[0].mxu0
    %488 = vmatprep.mubr.bf16.mxu0 %v282
    %489 = vmatmul.mubr.bf16.gmra.mrb[0].mxu0 %v281
    %v490 = vpop.f32.mrb[0].mxu0
    %v491 = vadd.f32 %v326, %v490
    %v492 = vpop.f32.mrb[0].mxu0
    %v493 = vpop.f32.mrb[0].mxu0
    %v494 = vadd.f32 %v326, %v493
    %v495 = vpop.f32.mrb[0].mxu0
    %496 = vmatprep.mubr.bf16.mxu0 %v284
    %497 = vmatmul.mubr.bf16.gmra.mrb[0].mxu0 %v283
    %v498 = vpop.f32.mrb[0].mxu0
    %v499 = vadd.f32 %v326, %v498
    %v500 = vpop.f32.mrb[0].mxu0
    %v501 = vpop.f32.mrb[0].mxu0
    %v502 = vadd.f32 %v326, %v501
    %v503 = vpop.f32.mrb[0].mxu0
    %504 = vmatprep.mubr.bf16.mxu0 %v286
    %505 = vmatmul.mubr.bf16.gmra.mrb[0].mxu0 %v285
    %v506 = vpop.f32.mrb[0].mxu0
    %v507 = vadd.f32 %v326, %v506
    %v508 = vpop.f32.mrb[0].mxu0
    %v509 = vpop.f32.mrb[0].mxu0
    %v510 = vadd.f32 %v326, %v509
    %v511 = vpop.f32.mrb[0].mxu0
    %512 = vmatprep.mubr.bf16.mxu0 %v288
    %513 = vmatmul.mubr.bf16.gmra.mrb[0].mxu0 %v287
    %v514 = vpop.f32.mrb[0].mxu0
    %v515 = vadd.f32 %v326, %v514
    %v516 = vpop.f32.mrb[0].mxu0
    %v517 = vpop.f32.mrb[0].mxu0
    %v518 = vadd.f32 %v326, %v517
    %v519 = vpop.f32.mrb[0].mxu0
    %520 = vdwg.mxu0
    %v521 = vmax.f32 %v459, 0.0
    %v522 = vmax.f32 %v462, 0.0
    %v523 = vmax.f32 %v467, 0.0
    %v524 = vmax.f32 %v470, 0.0
    %v525 = vmax.f32 %v475, 0.0
    %v526 = vmax.f32 %v478, 0.0
    %v527 = vmax.f32 %v483, 0.0
    %v528 = vmax.f32 %v486, 0.0
    %v529 = vmax.f32 %v491, 0.0
    %v530 = vmax.f32 %v494, 0.0
    %v531 = vmax.f32 %v499, 0.0
    %v532 = vmax.f32 %v502, 0.0
    %v533 = vmax.f32 %v507, 0.0
    %v534 = vmax.f32 %v510, 0.0
    %v535 = vmax.f32 %v515, 0.0
    %v536 = vmax.f32 %v518, 0.0
    %v537 = vld [vmem:[%s5] sm:$0x1]
    %v538 = vpack.c.bf16 %v522, %v521
    %v539 = vpack.c.bf16 %v524, %v523
    %v540 = vpack.c.bf16 %v526, %v525
    %v541 = vpack.c.bf16 %v528, %v527
    %v542 = vpack.c.bf16 %v530, %v529
    %v543 = vpack.c.bf16 %v532, %v531
    %v544 = vpack.c.bf16 %v534, %v533
    %v545 = vpack.c.bf16 %v536, %v535
    %v546 = vld [vmem:[#allocation2] sm:$0x1]
    %548 = vset.pattern.permute.xlu0 0
    %549 = vperm.xlu0 %548, %v546
    %v550 = vpop.permute.xlu0 %549
    %v552 = vlaneseq
    %v553 = vshrl.u32 %v552, 7
    %v554 = vsub.s32 0, %v553
    %v555 = vrot.slane %v550, %v554
    %556 = vmatprep.subr.bf16.mxu0 0
    %557 = vmatpush1.bf16.xpose.msra.mxu0 %v538
    %558 = vmatprep.subr.bf16.mxu0 0
    %559 = vmatpush1.bf16.xpose.msra.mxu0 %v539
    %560 = vmatprep.subr.bf16.mxu0 0
    %561 = vmatpush1.bf16.xpose.msra.mxu0 %v540
    %562 = vmatprep.subr.bf16.mxu0 0
    %563 = vmatpush1.bf16.xpose.msra.mxu0 %v541
    %564 = vmatprep.subr.bf16.mxu0 0
    %565 = vmatpush1.bf16.xpose.msra.mxu0 %v542
    %566 = vmatprep.subr.bf16.mxu0 0
    %567 = vmatpush1.bf16.xpose.msra.mxu0 %v543
    %568 = vmatprep.subr.bf16.mxu0 0
    %569 = vmatpush1.bf16.xpose.msra.mxu0 %v544
    %570 = vmatprep.subr.bf16.mxu0 0
    %571 = vmatpush1.bf16.xpose.msra.mxu0 %v545
    %572 = vmatprep.subr.bf16.mxu0 0
    %573 = vmatpush1.bf16.xpose.msra.mxu0 0
    %574 = vmatprep.subr.bf16.mxu0 0
    %575 = vmatpush1.bf16.xpose.msra.mxu0 0
    %576 = vmatprep.subr.bf16.mxu0 0
    %577 = vmatpush1.bf16.xpose.msra.mxu0 0
    %578 = vmatprep.subr.bf16.mxu0 0
    %579 = vmatpush1.bf16.xpose.msra.mxu0 0
    %580 = vmatprep.subr.bf16.mxu0 0
    %581 = vmatpush1.bf16.xpose.msra.mxu0 0
    %582 = vmatprep.subr.bf16.mxu0 0
    %583 = vmatpush1.bf16.xpose.msra.mxu0 0
    %584 = vmatprep.subr.bf16.mxu0 0
    %585 = vmatpush1.bf16.xpose.msra.mxu0 0
    %586 = vmatprep.subr.bf16.mxu0 0
    %587 = vmatpush1.bf16.xpose.msra.mxu0 0
    %588 = vmatprep.mubr.bf16.mxu0 0
    %589 = vmatmul.mubr.bf16.gmra.mrb[0].mxu0 %v537
    %v590 = vpop.f32.mrb[0].mxu0
    %v591 = vadd.f32 %v555, %v590
    %v592 = vpop.f32.mrb[0].mxu0
    %v593 = vpop.f32.mrb[0].mxu0
    %v594 = vpop.f32.mrb[0].mxu0
    %595 = vdwg.mxu0
    %596 = vst [vmem:[#allocation3] sm:$0x1] %v591
    // Predicated region
    $region30: #{tpu_custom_call.1} parent=1 // pred_check
      _
    $region31: #{tpu_custom_call.1} parent=1 // pred_check_branch
      %598 = sbr.rel (0) target = $region33
    $region32: #{tpu_custom_call.1} parent=1 // pred_region
      %s600 = ssub.s32 16, 16
      %601 = vsyncadd [#allocation4], %s600
      %s603 = sshll.u32 [#allocation3], 4
      %s604 = int_to_ptr.vmem [resolvable:$true] %s603
      %606 = dma.vmem_to_hbm [thread:$0]  %s604, 16, %s7, [#allocation4]
    $region33: #{tpu_custom_call.1} parent=1 // pred_fallthru
      _
    // Predicated region
    $region34: #{tpu_custom_call.1} parent=1 // pred_check
      _
    $region35: #{tpu_custom_call.1} parent=1 // pred_check_branch
      %608 = sbr.rel (0) target = $region37
    $region36: #{tpu_custom_call.1} parent=1 // pred_region
      %609 = dma.done [#allocation4], 16
    $region37: #{tpu_custom_call.1} parent=1 // pred_fallthru
      _
    %610 = vsyncpa [#allocation4], 1

</llo_original>
